<compile_context>
chip_gen: v7x
topology: tpu7x:2x2x1
jax: 0.10.0
libtpu: 0.0.40
codegen_flags: <defaults>
</compile_context>

<pallas_src>
import math

import jax
import jax.numpy as jnp
from jax.experimental import pallas as pl
from jax.experimental.pallas import tpu as pltpu


def _round_up(x, m):
    return ((x + m - 1) // m) * m


def _default_tile_b(batch):
    """Batch tile size.

    Small batches: a single full-extent tile (kernel is fixed-overhead bound; full-extent
    blocks are always layout-legal and need no padding). Larger batches: at least two tiles
    so v7x's second TensorCore gets work via the "parallel" grid axis, in multiples of 128
    rows (keeps the transposed [2, tile_b] output block lane-aligned and the bf16 MXU feed
    fully packed), capped at 1024 rows.
    """
    if batch <= 256:
        return batch
    return min(1024, _round_up(pl.cdiv(batch, 2), 128))


def _twin_mlp_kernel(s_ref, a_ref, w1s_ref, w1a_ref, b1_ref,
                     w2a_ref, w2b_ref, b2_ref, w3_ref, b3_ref, out_ref):
    """Fused twin-head 3-layer MLP on one batch tile.

    Matmuls run on the MXU in bf16 with f32 accumulation; bias-add / ReLU epilogues stay in
    f32 on the VPU (v5e has no bf16 VPU path).
    """
    # astype is a trace-time no-op if the caller already supplies bf16 activations.
    s = s_ref[...].astype(jnp.bfloat16)
    a = a_ref[...].astype(jnp.bfloat16)

    # Layer 1: split-K matmul replaces the wrapper-side concat([state, action]).
    h1 = (jnp.dot(s, w1s_ref[...], preferred_element_type=jnp.float32)
          + jnp.dot(a, w1a_ref[...], preferred_element_type=jnp.float32)
          + b1_ref[...])
    h1 = jnp.maximum(h1, 0.0).astype(jnp.bfloat16)           # [tile_b, 2H]

    # Layer 2: per-head dots -- no zero-padded block-diagonal matmul.
    hidden = w2a_ref.shape[0]
    h2a = jnp.dot(h1[:, :hidden], w2a_ref[...], preferred_element_type=jnp.float32)
    h2b = jnp.dot(h1[:, hidden:], w2b_ref[...], preferred_element_type=jnp.float32)
    h2 = jnp.concatenate([h2a, h2b], axis=1) + b2_ref[...]   # [tile_b, 2H]
    h2 = jnp.maximum(h2, 0.0).astype(jnp.bfloat16)

    # Layer 3: tiny [2H, 2] block-diagonal head -> column 0 is q1, column 1 is q2.
    q = jnp.dot(h2, w3_ref[...], preferred_element_type=jnp.float32) + b3_ref[...]

    # Lane-dense store: [2, tile_b] (small transpose -> XLU) instead of a 2-lane-wide
    # masked store per output row.
    out_ref[...] = q.T.astype(out_ref.dtype)


def twin_q_forward(state, action, fused_params, *, tile_b=None):
    """TwinQNetwork.forward: returns (q1, q2), each [B, 1]."""
    w1s, w1a, b1, w2a, w2b, b2, w3, b3 = fused_params
    batch, s_dim = state.shape
    a_dim = action.shape[1]
    two_h = w1s.shape[1]
    hidden = w2a.shape[0]
    n_out = w3.shape[1]  # = 2 (one output column per head)

    if tile_b is None:
        tile_b = _default_tile_b(batch)
    grid = (pl.cdiv(batch, tile_b),)

    def _call(weight_mode):
        def w_spec(shape):
            if weight_mode is None:
                return pl.BlockSpec(shape, lambda i: (0, 0))
            return pl.BlockSpec(shape, lambda i: (0, 0), pipeline_mode=weight_mode)

        return pl.pallas_call(
            _twin_mlp_kernel,
            # Transposed (lane-dense) output: row 0 = q1, row 1 = q2.
            out_shape=jax.ShapeDtypeStruct((n_out, batch), jnp.float32),
            grid=grid,
            in_specs=[
                # Batch-tiled activations (double-buffered by Pallas across the grid).
                pl.BlockSpec((tile_b, s_dim), lambda i: (i, 0)),
                pl.BlockSpec((tile_b, a_dim), lambda i: (i, 0)),
                # Weights / biases: constant index maps -> fetched once, resident in VMEM.
                w_spec((s_dim, two_h)),
                w_spec((a_dim, two_h)),
                w_spec((1, two_h)),
                w_spec((hidden, hidden)),
                w_spec((hidden, hidden)),
                w_spec((1, two_h)),
                w_spec((two_h, n_out)),
                w_spec((1, n_out)),
            ],
            out_specs=pl.BlockSpec((n_out, tile_b), lambda i: (0, i)),
            compiler_params=pltpu.CompilerParams(
                dimension_semantics=("parallel",),  # shard batch tiles across TCs on v7x
            ),
        )(state, action, w1s, w1a, b1, w2a, w2b, b2, w3, b3)

    try:
        # Single-buffer the resident weights (their block index never changes), so only
        # activations and the output are double-buffered.
        out = _call(pl.Buffered(1))
    except Exception:
        # Fallback for JAX versions whose grid pipeliner does not accept Buffered(1).
        out = _call(None)

    q1 = out[0].reshape(-1, 1)
    q2 = out[1].reshape(-1, 1)
    return q1, q2


# ---------------------------------------------------------------------------
# Parameter construction (nn.Linear-style init) and twin-head fusion.
# ---------------------------------------------------------------------------

def _init_linear(key, in_features, out_features):
    """Deterministic nn.Linear-style init: U(-1/sqrt(in), 1/sqrt(in))."""
    kw, kb = jax.random.split(key)
    bound = 1.0 / math.sqrt(in_features)
    w = jax.random.uniform(kw, (in_features, out_features), jnp.float32, -bound, bound)
    b = jax.random.uniform(kb, (1, out_features), jnp.float32, -bound, bound)
    return w, b


def init_mlp_params(key, input_size, hidden_sizes, output_size):
    sizes = [input_size] + list(hidden_sizes) + [output_size]
    params = []
    for i in range(len(sizes) - 1):
        key, sub = jax.random.split(key)
        w, b = _init_linear(sub, sizes[i], sizes[i + 1])
        params.extend([w, b])
    return tuple(params)


def fuse_twin_params(q1_params, q2_params, state_dim):
    """Fuse two independent Q-head MLPs into one twin-MLP parameter set.

    Done ONCE at parameter-setup time (not per forward call). Layer-1 heads are concatenated
    along the output axis (and split along K into state/action rows); layer 2 stays per-head
    (the kernel issues two head-local dots); layer 3 is a tiny block-diagonal [2H, 2] head.
    Matmul weights are stored in bf16 (MXU-native); biases stay f32 for the f32 epilogue.
    """
    w1a_, b1a_, w2a_, b2a_, w3a_, b3a_ = q1_params
    w1b_, b1b_, w2b_, b2b_, w3b_, b3b_ = q2_params
    hidden = w2a_.shape[0]
    out = w3a_.shape[1]

    w1 = jnp.concatenate([w1a_, w1b_], axis=1)              # [S+A, 2H]
    w1s = w1[:state_dim]                                     # [S,   2H]
    w1a = w1[state_dim:]                                     # [A,   2H]
    b1 = jnp.concatenate([b1a_, b1b_], axis=1)               # [1, 2H]

    b2 = jnp.concatenate([b2a_, b2b_], axis=1)               # [1, 2H]

    zo = jnp.zeros((hidden, out), jnp.float32)
    w3 = jnp.block([[w3a_, zo], [zo, w3b_]])                 # [2H, 2] block-diagonal
    b3 = jnp.concatenate([b3a_, b3b_], axis=1)               # [1, 2]

    return (w1s.astype(jnp.bfloat16), w1a.astype(jnp.bfloat16), b1,
            w2a_.astype(jnp.bfloat16), w2b_.astype(jnp.bfloat16), b2,
            w3.astype(jnp.bfloat16), b3)


if __name__ == "__main__":
    # Small shapes consistent with a typical critic: batch=2, state=12, action=4.
    batch, state_dim, action_dim = 2, 12, 4
    hidden_sizes = (32, 32)
    output_size = 1
    input_size = state_dim + action_dim

    root = jax.random.PRNGKey(0)
    k_state, k_action, k_q1, k_q2 = jax.random.split(root, 4)

    state = jax.random.normal(k_state, (batch, state_dim), jnp.float32)
    action = jax.random.normal(k_action, (batch, action_dim), jnp.float32)

    q1_params = init_mlp_params(k_q1, input_size, hidden_sizes, output_size)
    q2_params = init_mlp_params(k_q2, input_size, hidden_sizes, output_size)
    fused = fuse_twin_params(q1_params, q2_params, state_dim)

    q1, q2 = twin_q_forward(state, action, fused)
    jax.block_until_ready((q1, q2))

    # Reference check in plain JAX f32 (same math as the PyTorch module).
    def ref_mlp(x, p):
        w1, b1, w2, b2, w3, b3 = p
        h = jnp.maximum(x @ w1 + b1, 0.0)
        h = jnp.maximum(h @ w2 + b2, 0.0)
        return h @ w3 + b3

    oa = jnp.concatenate([state, action], axis=1)
    r1 = ref_mlp(oa, q1_params)
    r2 = ref_mlp(oa, q2_params)
    # Loose tolerance: kernel uses bf16 MXU inputs/weights with f32 accumulation.
    assert jnp.allclose(q1, r1, atol=5e-2, rtol=5e-2), (q1, r1)
    assert jnp.allclose(q2, r2, atol=5e-2, rtol=5e-2), (q2, r2)
    assert q1.shape == (batch, output_size) and q2.shape == (batch, output_size)

    print("KERNEL_OK")
</pallas_src>

<mosaic_0001>
module attributes {stable_mosaic.version = 11 : i64} {
  func.func @_twin_mlp_kernel(%arg0: i32, %arg1: memref<2x12xf32, #tpu.memory_space<vmem>>, %arg2: memref<2x4xf32, #tpu.memory_space<vmem>>, %arg3: memref<12x64xbf16, #tpu.memory_space<vmem>>, %arg4: memref<4x64xbf16, #tpu.memory_space<vmem>>, %arg5: memref<1x64xf32, #tpu.memory_space<vmem>>, %arg6: memref<32x32xbf16, #tpu.memory_space<vmem>>, %arg7: memref<32x32xbf16, #tpu.memory_space<vmem>>, %arg8: memref<1x64xf32, #tpu.memory_space<vmem>>, %arg9: memref<64x2xbf16, #tpu.memory_space<vmem>>, %arg10: memref<1x2xf32, #tpu.memory_space<vmem>>, %arg11: memref<2x2xf32, #tpu.memory_space<vmem>>) attributes {dimension_semantics = [#tpu.dimension_semantics<parallel>], iteration_bounds = array<i64: 1>, scalar_prefetch = 0 : i64, scratch_operands = 0 : i64, tpu.core_type = #tpu.core_type<tc>, window_params = [{transform_indices = @transform_0, window_bounds = array<i64: 2, 12>}, {transform_indices = @transform_1, window_bounds = array<i64: 2, 4>}, {pipeline_mode = #tpu.pipeline_mode<synchronous>, transform_indices = @transform_2, window_bounds = array<i64: 12, 64>}, {pipeline_mode = #tpu.pipeline_mode<synchronous>, transform_indices = @transform_3, window_bounds = array<i64: 4, 64>}, {pipeline_mode = #tpu.pipeline_mode<synchronous>, transform_indices = @transform_4, window_bounds = array<i64: 1, 64>}, {pipeline_mode = #tpu.pipeline_mode<synchronous>, transform_indices = @transform_5, window_bounds = array<i64: 32, 32>}, {pipeline_mode = #tpu.pipeline_mode<synchronous>, transform_indices = @transform_6, window_bounds = array<i64: 32, 32>}, {pipeline_mode = #tpu.pipeline_mode<synchronous>, transform_indices = @transform_7, window_bounds = array<i64: 1, 64>}, {pipeline_mode = #tpu.pipeline_mode<synchronous>, transform_indices = @transform_8, window_bounds = array<i64: 64, 2>}, {pipeline_mode = #tpu.pipeline_mode<synchronous>, transform_indices = @transform_9, window_bounds = array<i64: 1, 2>}, {transform_indices = @transform_10, window_bounds = array<i64: 2, 2>}]} {
    %c0 = arith.constant 0 : index
    %c0_0 = arith.constant 0 : index
    %0 = vector.load %arg1[%c0, %c0_0] : memref<2x12xf32, #tpu.memory_space<vmem>>, vector<2x12xf32>
    %1 = arith.truncf %0 : vector<2x12xf32> to vector<2x12xbf16>
    %c0_1 = arith.constant 0 : index
    %c0_2 = arith.constant 0 : index
    %2 = vector.load %arg2[%c0_1, %c0_2] : memref<2x4xf32, #tpu.memory_space<vmem>>, vector<2x4xf32>
    %3 = arith.truncf %2 : vector<2x4xf32> to vector<2x4xbf16>
    %c0_3 = arith.constant 0 : index
    %c0_4 = arith.constant 0 : index
    %4 = vector.load %arg3[%c0_3, %c0_4] : memref<12x64xbf16, #tpu.memory_space<vmem>>, vector<12x64xbf16>
    %cst = arith.constant dense<0.000000e+00> : vector<2x64xf32>
    %5 = tpu.matmul %1, %4, %cst {dimension_numbers = #tpu.dot_dimension_numbers<[1], [0], [0], [1], [0, 0, 1, 1], [], []>} : vector<2x12xbf16>, vector<12x64xbf16>, vector<2x64xf32> -> vector<2x64xf32>
    %c0_5 = arith.constant 0 : index
    %c0_6 = arith.constant 0 : index
    %6 = vector.load %arg4[%c0_5, %c0_6] : memref<4x64xbf16, #tpu.memory_space<vmem>>, vector<4x64xbf16>
    %cst_7 = arith.constant dense<0.000000e+00> : vector<2x64xf32>
    %7 = tpu.matmul %3, %6, %cst_7 {dimension_numbers = #tpu.dot_dimension_numbers<[1], [0], [0], [1], [0, 0, 1, 1], [], []>} : vector<2x4xbf16>, vector<4x64xbf16>, vector<2x64xf32> -> vector<2x64xf32>
    %8 = arith.addf %5, %7 : vector<2x64xf32>
    %c0_8 = arith.constant 0 : index
    %c0_9 = arith.constant 0 : index
    %9 = vector.load %arg5[%c0_8, %c0_9] : memref<1x64xf32, #tpu.memory_space<vmem>>, vector<1x64xf32>
    %10 = vector.broadcast %9 : vector<1x64xf32> to vector<2x64xf32>
    %11 = arith.addf %8, %10 : vector<2x64xf32>
    %cst_10 = arith.constant 0.000000e+00 : f32
    %12 = vector.broadcast %cst_10 : f32 to vector<2x64xf32>
    %13 = arith.maximumf %11, %12 : vector<2x64xf32>
    %14 = arith.truncf %13 : vector<2x64xf32> to vector<2x64xbf16>
    %15 = vector.extract_strided_slice %14 {offsets = [0, 0], sizes = [2, 32], strides = [1, 1]} : vector<2x64xbf16> to vector<2x32xbf16>
    %c0_11 = arith.constant 0 : index
    %c0_12 = arith.constant 0 : index
    %16 = vector.load %arg6[%c0_11, %c0_12] : memref<32x32xbf16, #tpu.memory_space<vmem>>, vector<32x32xbf16>
    %cst_13 = arith.constant dense<0.000000e+00> : vector<2x32xf32>
    %17 = tpu.matmul %15, %16, %cst_13 {dimension_numbers = #tpu.dot_dimension_numbers<[1], [0], [0], [1], [0, 0, 1, 1], [], []>} : vector<2x32xbf16>, vector<32x32xbf16>, vector<2x32xf32> -> vector<2x32xf32>
    %18 = vector.extract_strided_slice %14 {offsets = [0, 32], sizes = [2, 32], strides = [1, 1]} : vector<2x64xbf16> to vector<2x32xbf16>
    %c0_14 = arith.constant 0 : index
    %c0_15 = arith.constant 0 : index
    %19 = vector.load %arg7[%c0_14, %c0_15] : memref<32x32xbf16, #tpu.memory_space<vmem>>, vector<32x32xbf16>
    %cst_16 = arith.constant dense<0.000000e+00> : vector<2x32xf32>
    %20 = tpu.matmul %18, %19, %cst_16 {dimension_numbers = #tpu.dot_dimension_numbers<[1], [0], [0], [1], [0, 0, 1, 1], [], []>} : vector<2x32xbf16>, vector<32x32xbf16>, vector<2x32xf32> -> vector<2x32xf32>
    %21 = tpu.concatenate %17, %20 in 1 : vector<2x32xf32>, vector<2x32xf32> -> vector<2x64xf32>
    %c0_17 = arith.constant 0 : index
    %c0_18 = arith.constant 0 : index
    %22 = vector.load %arg8[%c0_17, %c0_18] : memref<1x64xf32, #tpu.memory_space<vmem>>, vector<1x64xf32>
    %23 = vector.broadcast %22 : vector<1x64xf32> to vector<2x64xf32>
    %24 = arith.addf %21, %23 : vector<2x64xf32>
    %cst_19 = arith.constant 0.000000e+00 : f32
    %25 = vector.broadcast %cst_19 : f32 to vector<2x64xf32>
    %26 = arith.maximumf %24, %25 : vector<2x64xf32>
    %27 = arith.truncf %26 : vector<2x64xf32> to vector<2x64xbf16>
    %c0_20 = arith.constant 0 : index
    %c0_21 = arith.constant 0 : index
    %28 = vector.load %arg9[%c0_20, %c0_21] : memref<64x2xbf16, #tpu.memory_space<vmem>>, vector<64x2xbf16>
    %cst_22 = arith.constant dense<0.000000e+00> : vector<2x2xf32>
    %29 = tpu.matmul %27, %28, %cst_22 {dimension_numbers = #tpu.dot_dimension_numbers<[1], [0], [0], [1], [0, 0, 1, 1], [], []>} : vector<2x64xbf16>, vector<64x2xbf16>, vector<2x2xf32> -> vector<2x2xf32>
    %c0_23 = arith.constant 0 : index
    %c0_24 = arith.constant 0 : index
    %30 = vector.load %arg10[%c0_23, %c0_24] : memref<1x2xf32, #tpu.memory_space<vmem>>, vector<1x2xf32>
    %31 = vector.broadcast %30 : vector<1x2xf32> to vector<2x2xf32>
    %32 = arith.addf %29, %31 : vector<2x2xf32>
    %33 = tpu.transpose %32, [1, 0] : vector<2x2xf32> -> vector<2x2xf32>
    %c0_25 = arith.constant 0 : index
    %c0_26 = arith.constant 0 : index
    %34 = vector.load %arg11[%c0_25, %c0_26] : memref<2x2xf32, #tpu.memory_space<vmem>>, vector<2x2xf32>
    tpu.vector_store %arg11[%c0_25, %c0_26], %33 {strides = array<i32>} : memref<2x2xf32, #tpu.memory_space<vmem>>, vector<2x2xf32>,
    return
  }
  func.func @transform_0(%arg0: i32) -> (i32, i32) {
    %c0_i32 = arith.constant 0 : i32
    %c0_i32_0 = arith.constant 0 : i32
    return %arg0, %c0_i32 : i32, i32
  }
  func.func @transform_1(%arg0: i32) -> (i32, i32) {
    %c0_i32 = arith.constant 0 : i32
    %c0_i32_0 = arith.constant 0 : i32
    return %arg0, %c0_i32 : i32, i32
  }
  func.func @transform_2(%arg0: i32) -> (i32, i32) {
    %c0_i32 = arith.constant 0 : i32
    %c0_i32_0 = arith.constant 0 : i32
    %c0_i32_1 = arith.constant 0 : i32
    return %c0_i32, %c0_i32_0 : i32, i32
  }
  func.func @transform_3(%arg0: i32) -> (i32, i32) {
    %c0_i32 = arith.constant 0 : i32
    %c0_i32_0 = arith.constant 0 : i32
    %c0_i32_1 = arith.constant 0 : i32
    return %c0_i32, %c0_i32_0 : i32, i32
  }
  func.func @transform_4(%arg0: i32) -> (i32, i32) {
    %c0_i32 = arith.constant 0 : i32
    %c0_i32_0 = arith.constant 0 : i32
    %c0_i32_1 = arith.constant 0 : i32
    return %c0_i32, %c0_i32_0 : i32, i32
  }
  func.func @transform_5(%arg0: i32) -> (i32, i32) {
    %c0_i32 = arith.constant 0 : i32
    %c0_i32_0 = arith.constant 0 : i32
    %c0_i32_1 = arith.constant 0 : i32
    return %c0_i32, %c0_i32_0 : i32, i32
  }
  func.func @transform_6(%arg0: i32) -> (i32, i32) {
    %c0_i32 = arith.constant 0 : i32
    %c0_i32_0 = arith.constant 0 : i32
    %c0_i32_1 = arith.constant 0 : i32
    return %c0_i32, %c0_i32_0 : i32, i32
  }
  func.func @transform_7(%arg0: i32) -> (i32, i32) {
    %c0_i32 = arith.constant 0 : i32
    %c0_i32_0 = arith.constant 0 : i32
    %c0_i32_1 = arith.constant 0 : i32
    return %c0_i32, %c0_i32_0 : i32, i32
  }
  func.func @transform_8(%arg0: i32) -> (i32, i32) {
    %c0_i32 = arith.constant 0 : i32
    %c0_i32_0 = arith.constant 0 : i32
    %c0_i32_1 = arith.constant 0 : i32
    return %c0_i32, %c0_i32_0 : i32, i32
  }
  func.func @transform_9(%arg0: i32) -> (i32, i32) {
    %c0_i32 = arith.constant 0 : i32
    %c0_i32_0 = arith.constant 0 : i32
    %c0_i32_1 = arith.constant 0 : i32
    return %c0_i32, %c0_i32_0 : i32, i32
  }
  func.func @transform_10(%arg0: i32) -> (i32, i32) {
    %c0_i32 = arith.constant 0 : i32
    %c0_i32_0 = arith.constant 0 : i32
    return %c0_i32, %arg0 : i32, i32
  }
}

module attributes {stable_mosaic.version = 11 : i64} {
  func.func @_twin_mlp_kernel(%arg0: i32, %arg1: memref<2x12xf32, #tpu.memory_space<vmem>>, %arg2: memref<2x4xf32, #tpu.memory_space<vmem>>, %arg3: memref<12x64xbf16, #tpu.memory_space<vmem>>, %arg4: memref<4x64xbf16, #tpu.memory_space<vmem>>, %arg5: memref<1x64xf32, #tpu.memory_space<vmem>>, %arg6: memref<32x32xbf16, #tpu.memory_space<vmem>>, %arg7: memref<32x32xbf16, #tpu.memory_space<vmem>>, %arg8: memref<1x64xf32, #tpu.memory_space<vmem>>, %arg9: memref<64x2xbf16, #tpu.memory_space<vmem>>, %arg10: memref<1x2xf32, #tpu.memory_space<vmem>>, %arg11: memref<2x2xf32, #tpu.memory_space<vmem>>) attributes {dimension_semantics = [#tpu.dimension_semantics<parallel>], iteration_bounds = array<i64: 1>, scalar_prefetch = 0 : i64, scratch_operands = 0 : i64, tpu.core_type = #tpu.core_type<tc>, window_params = [{transform_indices = @transform_0, window_bounds = array<i64: 2, 12>}, {transform_indices = @transform_1, window_bounds = array<i64: 2, 4>}, {pipeline_mode = #tpu.pipeline_mode<synchronous>, transform_indices = @transform_2, window_bounds = array<i64: 12, 64>}, {pipeline_mode = #tpu.pipeline_mode<synchronous>, transform_indices = @transform_3, window_bounds = array<i64: 4, 64>}, {pipeline_mode = #tpu.pipeline_mode<synchronous>, transform_indices = @transform_4, window_bounds = array<i64: 1, 64>}, {pipeline_mode = #tpu.pipeline_mode<synchronous>, transform_indices = @transform_5, window_bounds = array<i64: 32, 32>}, {pipeline_mode = #tpu.pipeline_mode<synchronous>, transform_indices = @transform_6, window_bounds = array<i64: 32, 32>}, {pipeline_mode = #tpu.pipeline_mode<synchronous>, transform_indices = @transform_7, window_bounds = array<i64: 1, 64>}, {pipeline_mode = #tpu.pipeline_mode<synchronous>, transform_indices = @transform_8, window_bounds = array<i64: 64, 2>}, {pipeline_mode = #tpu.pipeline_mode<synchronous>, transform_indices = @transform_9, window_bounds = array<i64: 1, 2>}, {transform_indices = @transform_10, window_bounds = array<i64: 2, 2>}]} {
    %c0 = arith.constant 0 : index
    %c0_0 = arith.constant 0 : index
    %0 = vector.load %arg1[%c0, %c0_0] : memref<2x12xf32, #tpu.memory_space<vmem>>, vector<2x12xf32>
    %1 = arith.truncf %0 : vector<2x12xf32> to vector<2x12xbf16>
    %c0_1 = arith.constant 0 : index
    %c0_2 = arith.constant 0 : index
    %2 = vector.load %arg2[%c0_1, %c0_2] : memref<2x4xf32, #tpu.memory_space<vmem>>, vector<2x4xf32>
    %3 = arith.truncf %2 : vector<2x4xf32> to vector<2x4xbf16>
    %c0_3 = arith.constant 0 : index
    %c0_4 = arith.constant 0 : index
    %4 = vector.load %arg3[%c0_3, %c0_4] : memref<12x64xbf16, #tpu.memory_space<vmem>>, vector<12x64xbf16>
    %cst = arith.constant dense<0.000000e+00> : vector<2x64xf32>
    %5 = tpu.matmul %1, %4, %cst {dimension_numbers = #tpu.dot_dimension_numbers<[1], [0], [0], [1], [0, 0, 1, 1], [], []>} : vector<2x12xbf16>, vector<12x64xbf16>, vector<2x64xf32> -> vector<2x64xf32>
    %c0_5 = arith.constant 0 : index
    %c0_6 = arith.constant 0 : index
    %6 = vector.load %arg4[%c0_5, %c0_6] : memref<4x64xbf16, #tpu.memory_space<vmem>>, vector<4x64xbf16>
    %cst_7 = arith.constant dense<0.000000e+00> : vector<2x64xf32>
    %7 = tpu.matmul %3, %6, %cst_7 {dimension_numbers = #tpu.dot_dimension_numbers<[1], [0], [0], [1], [0, 0, 1, 1], [], []>} : vector<2x4xbf16>, vector<4x64xbf16>, vector<2x64xf32> -> vector<2x64xf32>
    %8 = arith.addf %5, %7 : vector<2x64xf32>
    %c0_8 = arith.constant 0 : index
    %c0_9 = arith.constant 0 : index
    %9 = vector.load %arg5[%c0_8, %c0_9] : memref<1x64xf32, #tpu.memory_space<vmem>>, vector<1x64xf32>
    %10 = vector.broadcast %9 : vector<1x64xf32> to vector<2x64xf32>
    %11 = arith.addf %8, %10 : vector<2x64xf32>
    %cst_10 = arith.constant 0.000000e+00 : f32
    %12 = vector.broadcast %cst_10 : f32 to vector<2x64xf32>
    %13 = arith.maximumf %11, %12 : vector<2x64xf32>
    %14 = arith.truncf %13 : vector<2x64xf32> to vector<2x64xbf16>
    %15 = vector.extract_strided_slice %14 {offsets = [0, 0], sizes = [2, 32], strides = [1, 1]} : vector<2x64xbf16> to vector<2x32xbf16>
    %c0_11 = arith.constant 0 : index
    %c0_12 = arith.constant 0 : index
    %16 = vector.load %arg6[%c0_11, %c0_12] : memref<32x32xbf16, #tpu.memory_space<vmem>>, vector<32x32xbf16>
    %cst_13 = arith.constant dense<0.000000e+00> : vector<2x32xf32>
    %17 = tpu.matmul %15, %16, %cst_13 {dimension_numbers = #tpu.dot_dimension_numbers<[1], [0], [0], [1], [0, 0, 1, 1], [], []>} : vector<2x32xbf16>, vector<32x32xbf16>, vector<2x32xf32> -> vector<2x32xf32>
    %18 = vector.extract_strided_slice %14 {offsets = [0, 32], sizes = [2, 32], strides = [1, 1]} : vector<2x64xbf16> to vector<2x32xbf16>
    %c0_14 = arith.constant 0 : index
    %c0_15 = arith.constant 0 : index
    %19 = vector.load %arg7[%c0_14, %c0_15] : memref<32x32xbf16, #tpu.memory_space<vmem>>, vector<32x32xbf16>
    %cst_16 = arith.constant dense<0.000000e+00> : vector<2x32xf32>
    %20 = tpu.matmul %18, %19, %cst_16 {dimension_numbers = #tpu.dot_dimension_numbers<[1], [0], [0], [1], [0, 0, 1, 1], [], []>} : vector<2x32xbf16>, vector<32x32xbf16>, vector<2x32xf32> -> vector<2x32xf32>
    %21 = tpu.concatenate %17, %20 in 1 : vector<2x32xf32>, vector<2x32xf32> -> vector<2x64xf32>
    %c0_17 = arith.constant 0 : index
    %c0_18 = arith.constant 0 : index
    %22 = vector.load %arg8[%c0_17, %c0_18] : memref<1x64xf32, #tpu.memory_space<vmem>>, vector<1x64xf32>
    %23 = vector.broadcast %22 : vector<1x64xf32> to vector<2x64xf32>
    %24 = arith.addf %21, %23 : vector<2x64xf32>
    %cst_19 = arith.constant 0.000000e+00 : f32
    %25 = vector.broadcast %cst_19 : f32 to vector<2x64xf32>
    %26 = arith.maximumf %24, %25 : vector<2x64xf32>
    %27 = arith.truncf %26 : vector<2x64xf32> to vector<2x64xbf16>
    %c0_20 = arith.constant 0 : index
    %c0_21 = arith.constant 0 : index
    %28 = vector.load %arg9[%c0_20, %c0_21] : memref<64x2xbf16, #tpu.memory_space<vmem>>, vector<64x2xbf16>
    %cst_22 = arith.constant dense<0.000000e+00> : vector<2x2xf32>
    %29 = tpu.matmul %27, %28, %cst_22 {dimension_numbers = #tpu.dot_dimension_numbers<[1], [0], [0], [1], [0, 0, 1, 1], [], []>} : vector<2x64xbf16>, vector<64x2xbf16>, vector<2x2xf32> -> vector<2x2xf32>
    %c0_23 = arith.constant 0 : index
    %c0_24 = arith.constant 0 : index
    %30 = vector.load %arg10[%c0_23, %c0_24] : memref<1x2xf32, #tpu.memory_space<vmem>>, vector<1x2xf32>
    %31 = vector.broadcast %30 : vector<1x2xf32> to vector<2x2xf32>
    %32 = arith.addf %29, %31 : vector<2x2xf32>
    %33 = tpu.transpose %32, [1, 0] : vector<2x2xf32> -> vector<2x2xf32>
    %c0_25 = arith.constant 0 : index
    %c0_26 = arith.constant 0 : index
    %34 = vector.load %arg11[%c0_25, %c0_26] : memref<2x2xf32, #tpu.memory_space<vmem>>, vector<2x2xf32>
    tpu.vector_store %arg11[%c0_25, %c0_26], %33 {strides = array<i32>} : memref<2x2xf32, #tpu.memory_space<vmem>>, vector<2x2xf32>,
    return
  }
  func.func @transform_0(%arg0: i32) -> (i32, i32) {
    %c0_i32 = arith.constant 0 : i32
    %c0_i32_0 = arith.constant 0 : i32
    return %arg0, %c0_i32 : i32, i32
  }
  func.func @transform_1(%arg0: i32) -> (i32, i32) {
    %c0_i32 = arith.constant 0 : i32
    %c0_i32_0 = arith.constant 0 : i32
    return %arg0, %c0_i32 : i32, i32
  }
  func.func @transform_2(%arg0: i32) -> (i32, i32) {
    %c0_i32 = arith.constant 0 : i32
    %c0_i32_0 = arith.constant 0 : i32
    %c0_i32_1 = arith.constant 0 : i32
    return %c0_i32, %c0_i32_0 : i32, i32
  }
  func.func @transform_3(%arg0: i32) -> (i32, i32) {
    %c0_i32 = arith.constant 0 : i32
    %c0_i32_0 = arith.constant 0 : i32
    %c0_i32_1 = arith.constant 0 : i32
    return %c0_i32, %c0_i32_0 : i32, i32
  }
  func.func @transform_4(%arg0: i32) -> (i32, i32) {
    %c0_i32 = arith.constant 0 : i32
    %c0_i32_0 = arith.constant 0 : i32
    %c0_i32_1 = arith.constant 0 : i32
    return %c0_i32, %c0_i32_0 : i32, i32
  }
  func.func @transform_5(%arg0: i32) -> (i32, i32) {
    %c0_i32 = arith.constant 0 : i32
    %c0_i32_0 = arith.constant 0 : i32
    %c0_i32_1 = arith.constant 0 : i32
    return %c0_i32, %c0_i32_0 : i32, i32
  }
  func.func @transform_6(%arg0: i32) -> (i32, i32) {
    %c0_i32 = arith.constant 0 : i32
    %c0_i32_0 = arith.constant 0 : i32
    %c0_i32_1 = arith.constant 0 : i32
    return %c0_i32, %c0_i32_0 : i32, i32
  }
  func.func @transform_7(%arg0: i32) -> (i32, i32) {
    %c0_i32 = arith.constant 0 : i32
    %c0_i32_0 = arith.constant 0 : i32
    %c0_i32_1 = arith.constant 0 : i32
    return %c0_i32, %c0_i32_0 : i32, i32
  }
  func.func @transform_8(%arg0: i32) -> (i32, i32) {
    %c0_i32 = arith.constant 0 : i32
    %c0_i32_0 = arith.constant 0 : i32
    %c0_i32_1 = arith.constant 0 : i32
    return %c0_i32, %c0_i32_0 : i32, i32
  }
  func.func @transform_9(%arg0: i32) -> (i32, i32) {
    %c0_i32 = arith.constant 0 : i32
    %c0_i32_0 = arith.constant 0 : i32
    %c0_i32_1 = arith.constant 0 : i32
    return %c0_i32, %c0_i32_0 : i32, i32
  }
  func.func @transform_10(%arg0: i32) -> (i32, i32) {
    %c0_i32 = arith.constant 0 : i32
    %c0_i32_0 = arith.constant 0 : i32
    return %c0_i32, %arg0 : i32, i32
  }
}

</mosaic_0001>

<llo_original>
// kernel: tpu_custom_call.1
$region0: #{tpu_custom_call.1}
  #allocation0 [shape = 'u32[]', space=smem, size = 0x4, offset = 0x4, fixed_abs, tag = 'smem constant byte address 0x4 - core index']
  #allocation1 [shape = 'u32[144,128]{1,0:T(1,128)}', space=vmem, size = 0x12000, scoped, tag = 'internal scratch']
  %s0 = inlined_call_operand.hbm [shape: f32[2,12], index: 0, kind: input, shape index: {}]
  %s1 = inlined_call_operand.hbm [shape: f32[2,4], index: 1, kind: input, shape index: {}]
  %s2 = inlined_call_operand.vmem [shape: bf16[12,64], index: 2, kind: input, shape index: {}]
  %s3 = inlined_call_operand.vmem [shape: bf16[4,64], index: 3, kind: input, shape index: {}]
  %s4 = inlined_call_operand.vmem [shape: f32[1,64], index: 4, kind: input, shape index: {}]
  %s5 = inlined_call_operand.vmem [shape: bf16[32,32], index: 5, kind: input, shape index: {}]
  %s6 = inlined_call_operand.vmem [shape: bf16[32,32], index: 6, kind: input, shape index: {}]
  %s7 = inlined_call_operand.vmem [shape: f32[1,64], index: 7, kind: input, shape index: {}]
  %s8 = inlined_call_operand.vmem [shape: bf16[64,2], index: 8, kind: input, shape index: {}]
  %s9 = inlined_call_operand.vmem [shape: f32[1,2], index: 9, kind: input, shape index: {}]
  %s10 = inlined_call_operand.hbm [shape: f32[2,2], index: 10, kind: output, shape index: {}]
  %s11 = sld [smem:[#allocation0]]
  $region58: #{tpu_custom_call.1} parent=0
    _
  %s13 = ssub.s32 1, %s11
  %s14 = scalar_select 0, %s13, %s11
  $region1: #{tpu_custom_call.1} parent=0
    #allocation2 [shape = 'u8[1024]{0}', space=vmem, size = 0x400, scoped, tag = 'input window, operand 0, single buffered']
    #allocation3 [shape = 's32[1]{0}', space=sflag, size = 0x4, scoped, tag = 'scoped memory for tpu_custom_call.1']
    #allocation4 [shape = 's32[1]{0}', space=sflag, size = 0x4, scoped, tag = 'scoped memory for tpu_custom_call.1']
    #allocation5 [shape = 'u8[1024]{0}', space=vmem, size = 0x400, scoped, tag = 'input window, operand 1, single buffered']
    #allocation6 [shape = 's32[1]{0}', space=sflag, size = 0x4, scoped, tag = 'scoped memory for tpu_custom_call.1']
    #allocation7 [shape = 'u8[1024]{0}', space=vmem, size = 0x400, scoped, tag = 'output window, operand 0, single buffered']
    %15 = vsyncpa [#allocation3], 0
    %16 = vsyncpa [#allocation6], 0
    %17 = vsyncpa [#allocation4], 0
    // Predicated region
    $region2: #{tpu_custom_call.1} parent=1 // pred_check
      _
    $region3: #{tpu_custom_call.1} parent=1 // pred_check_branch
      %19 = sbr.rel (0) target = $region5
    $region4: #{tpu_custom_call.1} parent=1 // pred_region
      %s21 = ssub.s32 32, 32
      %22 = vsyncadd [#allocation3], %s21
      %s24 = sshll.u32 [#allocation2], 4
      %s25 = int_to_ptr.vmem [resolvable:$true] %s24
      %27 = dma.hbm_to_vmem [thread:$0]  %s0, 32, %s25, [#allocation3]
    $region5: #{tpu_custom_call.1} parent=1 // pred_fallthru
      _
    // Predicated region
    $region6: #{tpu_custom_call.1} parent=1 // pred_check
      _
    $region7: #{tpu_custom_call.1} parent=1 // pred_check_branch
      %29 = sbr.rel (0) target = $region9
    $region8: #{tpu_custom_call.1} parent=1 // pred_region
      %s31 = ssub.s32 32, 32
      %32 = vsyncadd [#allocation6], %s31
      %s34 = sshll.u32 [#allocation5], 4
      %s35 = int_to_ptr.vmem [resolvable:$true] %s34
      %37 = dma.hbm_to_vmem [thread:$0]  %s1, 32, %s35, [#allocation6]
    $region9: #{tpu_custom_call.1} parent=1 // pred_fallthru
      _
    // Predicated region
    $region10: #{tpu_custom_call.1} parent=1 // pred_check
      _
    $region11: #{tpu_custom_call.1} parent=1 // pred_check_branch
      %39 = sbr.rel (0) target = $region13
    $region12: #{tpu_custom_call.1} parent=1 // pred_region
      _
    $region13: #{tpu_custom_call.1} parent=1 // pred_fallthru
      _
    // Predicated region
    $region14: #{tpu_custom_call.1} parent=1 // pred_check
      _
    $region15: #{tpu_custom_call.1} parent=1 // pred_check_branch
      %41 = sbr.rel (0) target = $region17
    $region16: #{tpu_custom_call.1} parent=1 // pred_region
      _
    $region17: #{tpu_custom_call.1} parent=1 // pred_fallthru
      _
    // Predicated region
    $region18: #{tpu_custom_call.1} parent=1 // pred_check
      _
    $region19: #{tpu_custom_call.1} parent=1 // pred_check_branch
      %43 = sbr.rel (0) target = $region21
    $region20: #{tpu_custom_call.1} parent=1 // pred_region
      _
    $region21: #{tpu_custom_call.1} parent=1 // pred_fallthru
      _
    // Predicated region
    $region22: #{tpu_custom_call.1} parent=1 // pred_check
      _
    $region23: #{tpu_custom_call.1} parent=1 // pred_check_branch
      %45 = sbr.rel (0) target = $region25
    $region24: #{tpu_custom_call.1} parent=1 // pred_region
      _
    $region25: #{tpu_custom_call.1} parent=1 // pred_fallthru
      _
    // Predicated region
    $region26: #{tpu_custom_call.1} parent=1 // pred_check
      _
    $region27: #{tpu_custom_call.1} parent=1 // pred_check_branch
      %47 = sbr.rel (0) target = $region29
    $region28: #{tpu_custom_call.1} parent=1 // pred_region
      _
    $region29: #{tpu_custom_call.1} parent=1 // pred_fallthru
      _
    // Predicated region
    $region30: #{tpu_custom_call.1} parent=1 // pred_check
      _
    $region31: #{tpu_custom_call.1} parent=1 // pred_check_branch
      %49 = sbr.rel (0) target = $region33
    $region32: #{tpu_custom_call.1} parent=1 // pred_region
      _
    $region33: #{tpu_custom_call.1} parent=1 // pred_fallthru
      _
    // Predicated region
    $region34: #{tpu_custom_call.1} parent=1 // pred_check
      _
    $region35: #{tpu_custom_call.1} parent=1 // pred_check_branch
      %51 = sbr.rel (0) target = $region37
    $region36: #{tpu_custom_call.1} parent=1 // pred_region
      _
    $region37: #{tpu_custom_call.1} parent=1 // pred_fallthru
      _
    // Predicated region
    $region38: #{tpu_custom_call.1} parent=1 // pred_check
      _
    $region39: #{tpu_custom_call.1} parent=1 // pred_check_branch
      %53 = sbr.rel (0) target = $region41
    $region40: #{tpu_custom_call.1} parent=1 // pred_region
      _
    $region41: #{tpu_custom_call.1} parent=1 // pred_fallthru
      _
    // Predicated region
    $region42: #{tpu_custom_call.1} parent=1 // pred_check
      _
    $region43: #{tpu_custom_call.1} parent=1 // pred_check_branch
      %55 = sbr.rel (0) target = $region45
    $region44: #{tpu_custom_call.1} parent=1 // pred_region
      %56 = dma.done [#allocation3], 32
    $region45: #{tpu_custom_call.1} parent=1 // pred_fallthru
      _
    // Predicated region
    $region46: #{tpu_custom_call.1} parent=1 // pred_check
      _
    $region47: #{tpu_custom_call.1} parent=1 // pred_check_branch
      %58 = sbr.rel (0) target = $region49
    $region48: #{tpu_custom_call.1} parent=1 // pred_region
      %59 = dma.done [#allocation6], 32
    $region49: #{tpu_custom_call.1} parent=1 // pred_fallthru
      _
    %v61 = vld [vmem:[#allocation2] sm:$0x3]
    %v62 = vpack.c.bf16 %v61, %v61
    %v63 = vld [vmem:[#allocation5] sm:$0x3]
    %v64 = vpack.c.bf16 %v63, %v63
    %v65 = vld [vmem:[%s2] sm:$0xf]
    %v66 = vld [vmem:[%s2 + $0x4] sm:$0x3]
    %v67 = vld [vmem:[%s3] sm:$0x3]
    %vm68 = vcmask 31744
    %v70 = vsel %vm68, %v64, 0
    %vm72 = vcmask 1041408
    %v74 = vsel %vm72, %v67, 0
    %76 = vmatprep.subr.bf16.mxu0 0
    %77 = vmatpush1.bf16.msra.mxu0 %v74
    %78 = vmatprep.subr.bf16.mxu0 0
    %79 = vmatpush1.bf16.msra.mxu0 0
    %80 = vmatprep.subr.bf16.mxu0 0
    %81 = vmatpush1.bf16.msra.mxu0 0
    %82 = vmatprep.subr.bf16.mxu0 0
    %83 = vmatpush1.bf16.msra.mxu0 0
    %84 = vmatprep.subr.bf16.mxu0 0
    %85 = vmatpush1.bf16.msra.mxu0 0
    %86 = vmatprep.subr.bf16.mxu0 0
    %87 = vmatpush1.bf16.msra.mxu0 0
    %88 = vmatprep.subr.bf16.mxu0 0
    %89 = vmatpush1.bf16.msra.mxu0 0
    %90 = vmatprep.subr.bf16.mxu0 0
    %91 = vmatpush1.bf16.msra.mxu0 0
    %92 = vmatprep.subr.bf16.mxu0 0
    %93 = vmatpush1.bf16.msra.mxu0 0
    %94 = vmatprep.subr.bf16.mxu0 0
    %95 = vmatpush1.bf16.msra.mxu0 0
    %96 = vmatprep.subr.bf16.mxu0 0
    %97 = vmatpush1.bf16.msra.mxu0 0
    %98 = vmatprep.subr.bf16.mxu0 0
    %99 = vmatpush1.bf16.msra.mxu0 0
    %100 = vmatprep.subr.bf16.mxu0 0
    %101 = vmatpush1.bf16.msra.mxu0 0
    %102 = vmatprep.subr.bf16.mxu0 0
    %103 = vmatpush1.bf16.msra.mxu0 0
    %104 = vmatprep.subr.bf16.mxu0 0
    %105 = vmatpush1.bf16.msra.mxu0 0
    %106 = vmatprep.subr.bf16.mxu0 0
    %107 = vmatpush1.bf16.msra.mxu0 0
    %108 = vmatprep.mubr.bf16.mxu0 0
    %109 = vmatmul.mubr.bf16.gmra.mrb[0].mxu0 %v70
    %v110 = vpop.f32.mrb[0].mxu0
    %v111 = vadd.f32 0.0, %v110
    %v112 = vpop.f32.mrb[0].mxu0
    %v113 = vpop.f32.mrb[0].mxu0
    %v114 = vpop.f32.mrb[0].mxu0
    %115 = vdwg.mxu0
    %v118 = vunpack.c.l.b16 %v65
    %v119 = vunpack.c.l.b16 %v66
    %v120 = vpack.c.b16 %v119, %v118
    %vm121 = vcmask 97280
    %v123 = vsel %vm121, %v62, 0
    %vm125 = vcmask 1045504
    %v127 = vsel %vm125, %v120, 0
    %129 = vmatprep.subr.bf16.mxu0 0
    %130 = vmatpush1.bf16.msra.mxu0 %v127
    %131 = vmatprep.subr.bf16.mxu0 0
    %132 = vmatpush1.bf16.msra.mxu0 0
    %133 = vmatprep.subr.bf16.mxu0 0
    %134 = vmatpush1.bf16.msra.mxu0 0
    %135 = vmatprep.subr.bf16.mxu0 0
    %136 = vmatpush1.bf16.msra.mxu0 0
    %137 = vmatprep.subr.bf16.mxu0 0
    %138 = vmatpush1.bf16.msra.mxu0 0
    %139 = vmatprep.subr.bf16.mxu0 0
    %140 = vmatpush1.bf16.msra.mxu0 0
    %141 = vmatprep.subr.bf16.mxu0 0
    %142 = vmatpush1.bf16.msra.mxu0 0
    %143 = vmatprep.subr.bf16.mxu0 0
    %144 = vmatpush1.bf16.msra.mxu0 0
    %145 = vmatprep.subr.bf16.mxu0 0
    %146 = vmatpush1.bf16.msra.mxu0 0
    %147 = vmatprep.subr.bf16.mxu0 0
    %148 = vmatpush1.bf16.msra.mxu0 0
    %149 = vmatprep.subr.bf16.mxu0 0
    %150 = vmatpush1.bf16.msra.mxu0 0
    %151 = vmatprep.subr.bf16.mxu0 0
    %152 = vmatpush1.bf16.msra.mxu0 0
    %153 = vmatprep.subr.bf16.mxu0 0
    %154 = vmatpush1.bf16.msra.mxu0 0
    %155 = vmatprep.subr.bf16.mxu0 0
    %156 = vmatpush1.bf16.msra.mxu0 0
    %157 = vmatprep.subr.bf16.mxu0 0
    %158 = vmatpush1.bf16.msra.mxu0 0
    %159 = vmatprep.subr.bf16.mxu0 0
    %160 = vmatpush1.bf16.msra.mxu0 0
    %161 = vmatprep.mubr.bf16.mxu0 0
    %162 = vmatmul.mubr.bf16.gmra.mrb[0].mxu0 %v123
    %v163 = vpop.f32.mrb[0].mxu0
    %v164 = vadd.f32 %v111, %v163
    %v165 = vpop.f32.mrb[0].mxu0
    %v166 = vpop.f32.mrb[0].mxu0
    %v167 = vpop.f32.mrb[0].mxu0
    %168 = vdwg.mxu0
    %v169 = vld [vmem:[%s4] sm:$0x1]
    %v171 = vlaneseq
    %v172 = vshrl.u32 %v171, 7
    %v173 = vsub.s32 0, %v172
    %v174 = vrot.slane %v169, %v173
    %v176 = vadd.f32 %v164, %v174
    %v177 = vmax.f32 %v176, 0.0
    %v178 = vpack.c.bf16 %v177, %v177
    %v179 = vld [vmem:[%s5] sm:$0xf]
    %v180 = vld [vmem:[%s5 + $0x4] sm:$0xf]
    %v181 = vld [vmem:[%s5 + $0x8] sm:$0xf]
    %v182 = vld [vmem:[%s5 + $0xc] sm:$0xf]
    %v187 = vunpack.c.l.b16 %v179
    %v188 = vunpack.c.l.b16 %v180
    %v189 = vunpack.c.l.b16 %v181
    %v190 = vunpack.c.l.b16 %v182
    %v191 = vpack.c.b16 %v188, %v187
    %v192 = vpack.c.b16 %v190, %v189
    %vm195 = vcmask 261120
    %v197 = vsel %vm195, %v178, 0
    %199 = vmatprep.subr.bf16.mxu0 0
    %200 = vmatpush1.bf16.msra.mxu0 %v191
    %201 = vmatprep.subr.bf16.mxu0 0
    %202 = vmatpush1.bf16.msra.mxu0 %v192
    %203 = vmatprep.subr.bf16.mxu0 0
    %204 = vmatpush1.bf16.msra.mxu0 0
    %205 = vmatprep.subr.bf16.mxu0 0
    %206 = vmatpush1.bf16.msra.mxu0 0
    %207 = vmatprep.subr.bf16.mxu0 0
    %208 = vmatpush1.bf16.msra.mxu0 0
    %209 = vmatprep.subr.bf16.mxu0 0
    %210 = vmatpush1.bf16.msra.mxu0 0
    %211 = vmatprep.subr.bf16.mxu0 0
    %212 = vmatpush1.bf16.msra.mxu0 0
    %213 = vmatprep.subr.bf16.mxu0 0
    %214 = vmatpush1.bf16.msra.mxu0 0
    %215 = vmatprep.subr.bf16.mxu0 0
    %216 = vmatpush1.bf16.msra.mxu0 0
    %217 = vmatprep.subr.bf16.mxu0 0
    %218 = vmatpush1.bf16.msra.mxu0 0
    %219 = vmatprep.subr.bf16.mxu0 0
    %220 = vmatpush1.bf16.msra.mxu0 0
    %221 = vmatprep.subr.bf16.mxu0 0
    %222 = vmatpush1.bf16.msra.mxu0 0
    %223 = vmatprep.subr.bf16.mxu0 0
    %224 = vmatpush1.bf16.msra.mxu0 0
    %225 = vmatprep.subr.bf16.mxu0 0
    %226 = vmatpush1.bf16.msra.mxu0 0
    %227 = vmatprep.subr.bf16.mxu0 0
    %228 = vmatpush1.bf16.msra.mxu0 0
    %229 = vmatprep.subr.bf16.mxu0 0
    %230 = vmatpush1.bf16.msra.mxu0 0
    %231 = vmatprep.mubr.bf16.mxu0 0
    %232 = vmatmul.mubr.bf16.gmra.mrb[0].mxu0 %v197
    %v233 = vpop.f32.mrb[0].mxu0
    %v234 = vadd.f32 0.0, %v233
    %v235 = vpop.f32.mrb[0].mxu0
    %v236 = vpop.f32.mrb[0].mxu0
    %v237 = vpop.f32.mrb[0].mxu0
    %238 = vdwg.mxu0
    %v239 = vld [vmem:[%s6] sm:$0xf]
    %v240 = vld [vmem:[%s6 + $0x4] sm:$0xf]
    %v241 = vld [vmem:[%s6 + $0x8] sm:$0xf]
    %v242 = vld [vmem:[%s6 + $0xc] sm:$0xf]
    %244 = vrot.lane.b32.xlu0 %v178, 96
    %v245 = vpop.permute.xlu0 %244
    %v250 = vunpack.c.l.b16 %v239
    %v251 = vunpack.c.l.b16 %v240
    %v252 = vunpack.c.l.b16 %v241
    %v253 = vunpack.c.l.b16 %v242
    %v254 = vpack.c.b16 %v251, %v250
    %v255 = vpack.c.b16 %v253, %v252
    %v259 = vsel %vm195, %v245, 0
    %261 = vmatprep.subr.bf16.mxu0 0
    %262 = vmatpush1.bf16.msra.mxu0 %v254
    %263 = vmatprep.subr.bf16.mxu0 0
    %264 = vmatpush1.bf16.msra.mxu0 %v255
    %265 = vmatprep.subr.bf16.mxu0 0
    %266 = vmatpush1.bf16.msra.mxu0 0
    %267 = vmatprep.subr.bf16.mxu0 0
    %268 = vmatpush1.bf16.msra.mxu0 0
    %269 = vmatprep.subr.bf16.mxu0 0
    %270 = vmatpush1.bf16.msra.mxu0 0
    %271 = vmatprep.subr.bf16.mxu0 0
    %272 = vmatpush1.bf16.msra.mxu0 0
    %273 = vmatprep.subr.bf16.mxu0 0
    %274 = vmatpush1.bf16.msra.mxu0 0
    %275 = vmatprep.subr.bf16.mxu0 0
    %276 = vmatpush1.bf16.msra.mxu0 0
    %277 = vmatprep.subr.bf16.mxu0 0
    %278 = vmatpush1.bf16.msra.mxu0 0
    %279 = vmatprep.subr.bf16.mxu0 0
    %280 = vmatpush1.bf16.msra.mxu0 0
    %281 = vmatprep.subr.bf16.mxu0 0
    %282 = vmatpush1.bf16.msra.mxu0 0
    %283 = vmatprep.subr.bf16.mxu0 0
    %284 = vmatpush1.bf16.msra.mxu0 0
    %285 = vmatprep.subr.bf16.mxu0 0
    %286 = vmatpush1.bf16.msra.mxu0 0
    %287 = vmatprep.subr.bf16.mxu0 0
    %288 = vmatpush1.bf16.msra.mxu0 0
    %289 = vmatprep.subr.bf16.mxu0 0
    %290 = vmatpush1.bf16.msra.mxu0 0
    %291 = vmatprep.subr.bf16.mxu0 0
    %292 = vmatpush1.bf16.msra.mxu0 0
    %293 = vmatprep.mubr.bf16.mxu0 0
    %294 = vmatmul.mubr.bf16.gmra.mrb[0].mxu0 %v259
    %v295 = vpop.f32.mrb[0].mxu0
    %v296 = vadd.f32 0.0, %v295
    %v297 = vpop.f32.mrb[0].mxu0
    %v298 = vpop.f32.mrb[0].mxu0
    %v299 = vpop.f32.mrb[0].mxu0
    %300 = vdwg.mxu0
    %302 = vrot.lane.b32.xlu0 %v296, 32
    %v303 = vpop.permute.xlu0 %302
    %v305 = vsel %vm195, %v234, %v303
    %v306 = vld [vmem:[%s7] sm:$0x1]
    %v308 = vlaneseq
    %v309 = vshrl.u32 %v308, 7
    %v310 = vsub.s32 0, %v309
    %v311 = vrot.slane %v306, %v310
    %v313 = vadd.f32 %v305, %v311
    %v314 = vmax.f32 %v313, 0.0
    %v315 = vpack.c.bf16 %v314, %v314
    %v316 = vld [vmem:[%s8] sm:$0xf]
    %v317 = vld [vmem:[%s8 + $0x4] sm:$0xf]
    %v318 = vld [vmem:[%s8 + $0x8] sm:$0xf]
    %v319 = vld [vmem:[%s8 + $0xc] sm:$0xf]
    %v320 = vld [vmem:[%s8 + $0x10] sm:$0xf]
    %v321 = vld [vmem:[%s8 + $0x14] sm:$0xf]
    %v322 = vld [vmem:[%s8 + $0x18] sm:$0xf]
    %v323 = vld [vmem:[%s8 + $0x1c] sm:$0xf]
    %v324 = vld [vmem:[%s9] sm:$0x1]
    %v326 = vlaneseq
    %v327 = vshrl.u32 %v326, 7
    %v328 = vsub.s32 0, %v327
    %v329 = vrot.slane %v324, %v328
    %v339 = vunpack.c.l.b16 %v316
    %v340 = vunpack.c.l.b16 %v317
    %v341 = vunpack.c.l.b16 %v318
    %v342 = vunpack.c.l.b16 %v319
    %v343 = vunpack.c.l.b16 %v320
    %v344 = vunpack.c.l.b16 %v321
    %v345 = vunpack.c.l.b16 %v322
    %v346 = vunpack.c.l.b16 %v323
    %v347 = vpack.c.b16 %v340, %v339
    %v348 = vpack.c.b16 %v342, %v341
    %v349 = vpack.c.b16 %v344, %v343
    %v350 = vpack.c.b16 %v346, %v345
    %vm355 = vcmask 523264
    %v357 = vsel %vm355, %v315, 0
    %359 = vmatprep.subr.bf16.mxu0 0
    %360 = vmatpush1.bf16.msra.mxu0 %v347
    %361 = vmatprep.subr.bf16.mxu0 0
    %362 = vmatpush1.bf16.msra.mxu0 %v348
    %363 = vmatprep.subr.bf16.mxu0 0
    %364 = vmatpush1.bf16.msra.mxu0 %v349
    %365 = vmatprep.subr.bf16.mxu0 0
    %366 = vmatpush1.bf16.msra.mxu0 %v350
    %367 = vmatprep.subr.bf16.mxu0 0
    %368 = vmatpush1.bf16.msra.mxu0 0
    %369 = vmatprep.subr.bf16.mxu0 0
    %370 = vmatpush1.bf16.msra.mxu0 0
    %371 = vmatprep.subr.bf16.mxu0 0
    %372 = vmatpush1.bf16.msra.mxu0 0
    %373 = vmatprep.subr.bf16.mxu0 0
    %374 = vmatpush1.bf16.msra.mxu0 0
    %375 = vmatprep.subr.bf16.mxu0 0
    %376 = vmatpush1.bf16.msra.mxu0 0
    %377 = vmatprep.subr.bf16.mxu0 0
    %378 = vmatpush1.bf16.msra.mxu0 0
    %379 = vmatprep.subr.bf16.mxu0 0
    %380 = vmatpush1.bf16.msra.mxu0 0
    %381 = vmatprep.subr.bf16.mxu0 0
    %382 = vmatpush1.bf16.msra.mxu0 0
    %383 = vmatprep.subr.bf16.mxu0 0
    %384 = vmatpush1.bf16.msra.mxu0 0
    %385 = vmatprep.subr.bf16.mxu0 0
    %386 = vmatpush1.bf16.msra.mxu0 0
    %387 = vmatprep.subr.bf16.mxu0 0
    %388 = vmatpush1.bf16.msra.mxu0 0
    %389 = vmatprep.subr.bf16.mxu0 0
    %390 = vmatpush1.bf16.msra.mxu0 0
    %391 = vmatprep.mubr.bf16.mxu0 0
    %392 = vmatmul.mubr.bf16.gmra.mrb[0].mxu0 %v357
    %v393 = vpop.f32.mrb[0].mxu0
    %v394 = vadd.f32 %v329, %v393
    %v395 = vpop.f32.mrb[0].mxu0
    %v396 = vpop.f32.mrb[0].mxu0
    %v397 = vpop.f32.mrb[0].mxu0
    %398 = vdwg.mxu0
    %399 = vxpose.xlu0.b32.start [1/16] %v394, 128
    %400 = vxpose.xlu0.b32.cont [2/16] 0.0, 128
    %401 = vxpose.xlu0.b32.cont [3/16] 0.0, 128
    %402 = vxpose.xlu0.b32.cont [4/16] 0.0, 128
    %403 = vxpose.xlu0.b32.cont [5/16] 0.0, 128
    %404 = vxpose.xlu0.b32.cont [6/16] 0.0, 128
    %405 = vxpose.xlu0.b32.cont [7/16] 0.0, 128
    %406 = vxpose.xlu0.b32.cont [8/16] 0.0, 128
    %407 = vxpose.xlu0.b32.cont [9/16] 0.0, 128
    %408 = vxpose.xlu0.b32.cont [10/16] 0.0, 128
    %409 = vxpose.xlu0.b32.cont [11/16] 0.0, 128
    %410 = vxpose.xlu0.b32.cont [12/16] 0.0, 128
    %411 = vxpose.xlu0.b32.cont [13/16] 0.0, 128
    %412 = vxpose.xlu0.b32.cont [14/16] 0.0, 128
    %413 = vxpose.xlu0.b32.cont [15/16] 0.0, 128
    %414 = vxpose.xlu0.b32.end [16/16] 0.0, 128
    %v415 = vpop.trf.xlu0
    %v416 = vpop.trf.xlu0
    %v417 = vpop.trf.xlu0
    %v418 = vpop.trf.xlu0
    %v419 = vpop.trf.xlu0
    %v420 = vpop.trf.xlu0
    %v421 = vpop.trf.xlu0
    %v422 = vpop.trf.xlu0
    %v423 = vpop.trf.xlu0
    %v424 = vpop.trf.xlu0
    %v425 = vpop.trf.xlu0
    %v426 = vpop.trf.xlu0
    %v427 = vpop.trf.xlu0
    %v428 = vpop.trf.xlu0
    %v429 = vpop.trf.xlu0
    %v430 = vpop.trf.xlu0
    %vm431 = vcmask 9216
    %432 = vst.msk [vmem:[#allocation7] sm:$0x3] %vm431, %v415
    // Predicated region
    $region50: #{tpu_custom_call.1} parent=1 // pred_check
      _
    $region51: #{tpu_custom_call.1} parent=1 // pred_check_branch
      %434 = sbr.rel (0) target = $region53
    $region52: #{tpu_custom_call.1} parent=1 // pred_region
      %s436 = ssub.s32 32, 32
      %437 = vsyncadd [#allocation4], %s436
      %s439 = sshll.u32 [#allocation7], 4
      %s440 = int_to_ptr.vmem [resolvable:$true] %s439
      %442 = dma.vmem_to_hbm [thread:$0]  %s440, 32, %s10, [#allocation4]
    $region53: #{tpu_custom_call.1} parent=1 // pred_fallthru
      _
    // Predicated region
    $region54: #{tpu_custom_call.1} parent=1 // pred_check
      _
    $region55: #{tpu_custom_call.1} parent=1 // pred_check_branch
      %444 = sbr.rel (0) target = $region57
    $region56: #{tpu_custom_call.1} parent=1 // pred_region
      %445 = dma.done [#allocation4], 32
    $region57: #{tpu_custom_call.1} parent=1 // pred_fallthru
      _
    %446 = vsyncpa [#allocation3], 1
    %447 = vsyncpa [#allocation6], 1
    %448 = vsyncpa [#allocation4], 1

// kernel: tpu_custom_call.1
$region0: #{tpu_custom_call.1}
  #allocation0 [shape = 'u32[]', space=smem, size = 0x4, offset = 0x4, fixed_abs, tag = 'smem constant byte address 0x4 - core index']
  #allocation1 [shape = 'u32[144,128]{1,0:T(1,128)}', space=vmem, size = 0x12000, scoped, tag = 'internal scratch']
  %s0 = inlined_call_operand.hbm [shape: f32[2,12], index: 0, kind: input, shape index: {}]
  %s1 = inlined_call_operand.hbm [shape: f32[2,4], index: 1, kind: input, shape index: {}]
  %s2 = inlined_call_operand.vmem [shape: bf16[12,64], index: 2, kind: input, shape index: {}]
  %s3 = inlined_call_operand.vmem [shape: bf16[4,64], index: 3, kind: input, shape index: {}]
  %s4 = inlined_call_operand.vmem [shape: f32[1,64], index: 4, kind: input, shape index: {}]
  %s5 = inlined_call_operand.vmem [shape: bf16[32,32], index: 5, kind: input, shape index: {}]
  %s6 = inlined_call_operand.vmem [shape: bf16[32,32], index: 6, kind: input, shape index: {}]
  %s7 = inlined_call_operand.vmem [shape: f32[1,64], index: 7, kind: input, shape index: {}]
  %s8 = inlined_call_operand.vmem [shape: bf16[64,2], index: 8, kind: input, shape index: {}]
  %s9 = inlined_call_operand.vmem [shape: f32[1,2], index: 9, kind: input, shape index: {}]
  %s10 = inlined_call_operand.hbm [shape: f32[2,2], index: 10, kind: output, shape index: {}]
  %s11 = sld [smem:[#allocation0]]
  $region58: #{tpu_custom_call.1} parent=0
    _
  %s13 = ssub.s32 1, %s11
  %s14 = scalar_select 0, %s13, %s11
  $region1: #{tpu_custom_call.1} parent=0
    #allocation2 [shape = 'u8[1024]{0}', space=vmem, size = 0x400, scoped, tag = 'input window, operand 0, single buffered']
    #allocation3 [shape = 's32[1]{0}', space=sflag, size = 0x4, scoped, tag = 'scoped memory for tpu_custom_call.1']
    #allocation4 [shape = 's32[1]{0}', space=sflag, size = 0x4, scoped, tag = 'scoped memory for tpu_custom_call.1']
    #allocation5 [shape = 'u8[1024]{0}', space=vmem, size = 0x400, scoped, tag = 'input window, operand 1, single buffered']
    #allocation6 [shape = 's32[1]{0}', space=sflag, size = 0x4, scoped, tag = 'scoped memory for tpu_custom_call.1']
    #allocation7 [shape = 'u8[1024]{0}', space=vmem, size = 0x400, scoped, tag = 'output window, operand 0, single buffered']
    %15 = vsyncpa [#allocation3], 0
    %16 = vsyncpa [#allocation6], 0
    %17 = vsyncpa [#allocation4], 0
    // Predicated region
    $region2: #{tpu_custom_call.1} parent=1 // pred_check
      _
    $region3: #{tpu_custom_call.1} parent=1 // pred_check_branch
      %19 = sbr.rel (0) target = $region5
    $region4: #{tpu_custom_call.1} parent=1 // pred_region
      %s21 = ssub.s32 32, 32
      %22 = vsyncadd [#allocation3], %s21
      %s24 = sshll.u32 [#allocation2], 4
      %s25 = int_to_ptr.vmem [resolvable:$true] %s24
      %27 = dma.hbm_to_vmem [thread:$0]  %s0, 32, %s25, [#allocation3]
    $region5: #{tpu_custom_call.1} parent=1 // pred_fallthru
      _
    // Predicated region
    $region6: #{tpu_custom_call.1} parent=1 // pred_check
      _
    $region7: #{tpu_custom_call.1} parent=1 // pred_check_branch
      %29 = sbr.rel (0) target = $region9
    $region8: #{tpu_custom_call.1} parent=1 // pred_region
      %s31 = ssub.s32 32, 32
      %32 = vsyncadd [#allocation6], %s31
      %s34 = sshll.u32 [#allocation5], 4
      %s35 = int_to_ptr.vmem [resolvable:$true] %s34
      %37 = dma.hbm_to_vmem [thread:$0]  %s1, 32, %s35, [#allocation6]
    $region9: #{tpu_custom_call.1} parent=1 // pred_fallthru
      _
    // Predicated region
    $region10: #{tpu_custom_call.1} parent=1 // pred_check
      _
    $region11: #{tpu_custom_call.1} parent=1 // pred_check_branch
      %39 = sbr.rel (0) target = $region13
    $region12: #{tpu_custom_call.1} parent=1 // pred_region
      _
    $region13: #{tpu_custom_call.1} parent=1 // pred_fallthru
      _
    // Predicated region
    $region14: #{tpu_custom_call.1} parent=1 // pred_check
      _
    $region15: #{tpu_custom_call.1} parent=1 // pred_check_branch
      %41 = sbr.rel (0) target = $region17
    $region16: #{tpu_custom_call.1} parent=1 // pred_region
      _
    $region17: #{tpu_custom_call.1} parent=1 // pred_fallthru
      _
    // Predicated region
    $region18: #{tpu_custom_call.1} parent=1 // pred_check
      _
    $region19: #{tpu_custom_call.1} parent=1 // pred_check_branch
      %43 = sbr.rel (0) target = $region21
    $region20: #{tpu_custom_call.1} parent=1 // pred_region
      _
    $region21: #{tpu_custom_call.1} parent=1 // pred_fallthru
      _
    // Predicated region
    $region22: #{tpu_custom_call.1} parent=1 // pred_check
      _
    $region23: #{tpu_custom_call.1} parent=1 // pred_check_branch
      %45 = sbr.rel (0) target = $region25
    $region24: #{tpu_custom_call.1} parent=1 // pred_region
      _
    $region25: #{tpu_custom_call.1} parent=1 // pred_fallthru
      _
    // Predicated region
    $region26: #{tpu_custom_call.1} parent=1 // pred_check
      _
    $region27: #{tpu_custom_call.1} parent=1 // pred_check_branch
      %47 = sbr.rel (0) target = $region29
    $region28: #{tpu_custom_call.1} parent=1 // pred_region
      _
    $region29: #{tpu_custom_call.1} parent=1 // pred_fallthru
      _
    // Predicated region
    $region30: #{tpu_custom_call.1} parent=1 // pred_check
      _
    $region31: #{tpu_custom_call.1} parent=1 // pred_check_branch
      %49 = sbr.rel (0) target = $region33
    $region32: #{tpu_custom_call.1} parent=1 // pred_region
      _
    $region33: #{tpu_custom_call.1} parent=1 // pred_fallthru
      _
    // Predicated region
    $region34: #{tpu_custom_call.1} parent=1 // pred_check
      _
    $region35: #{tpu_custom_call.1} parent=1 // pred_check_branch
      %51 = sbr.rel (0) target = $region37
    $region36: #{tpu_custom_call.1} parent=1 // pred_region
      _
    $region37: #{tpu_custom_call.1} parent=1 // pred_fallthru
      _
    // Predicated region
    $region38: #{tpu_custom_call.1} parent=1 // pred_check
      _
    $region39: #{tpu_custom_call.1} parent=1 // pred_check_branch
      %53 = sbr.rel (0) target = $region41
    $region40: #{tpu_custom_call.1} parent=1 // pred_region
      _
    $region41: #{tpu_custom_call.1} parent=1 // pred_fallthru
      _
    // Predicated region
    $region42: #{tpu_custom_call.1} parent=1 // pred_check
      _
    $region43: #{tpu_custom_call.1} parent=1 // pred_check_branch
      %55 = sbr.rel (0) target = $region45
    $region44: #{tpu_custom_call.1} parent=1 // pred_region
      %56 = dma.done [#allocation3], 32
    $region45: #{tpu_custom_call.1} parent=1 // pred_fallthru
      _
    // Predicated region
    $region46: #{tpu_custom_call.1} parent=1 // pred_check
      _
    $region47: #{tpu_custom_call.1} parent=1 // pred_check_branch
      %58 = sbr.rel (0) target = $region49
    $region48: #{tpu_custom_call.1} parent=1 // pred_region
      %59 = dma.done [#allocation6], 32
    $region49: #{tpu_custom_call.1} parent=1 // pred_fallthru
      _
    %v61 = vld [vmem:[#allocation2] sm:$0x3]
    %v62 = vpack.c.bf16 %v61, %v61
    %v63 = vld [vmem:[#allocation5] sm:$0x3]
    %v64 = vpack.c.bf16 %v63, %v63
    %v65 = vld [vmem:[%s2] sm:$0xf]
    %v66 = vld [vmem:[%s2 + $0x4] sm:$0x3]
    %v67 = vld [vmem:[%s3] sm:$0x3]
    %vm68 = vcmask 31744
    %v70 = vsel %vm68, %v64, 0
    %vm72 = vcmask 1041408
    %v74 = vsel %vm72, %v67, 0
    %76 = vmatprep.subr.bf16.mxu0 0
    %77 = vmatpush1.bf16.msra.mxu0 %v74
    %78 = vmatprep.subr.bf16.mxu0 0
    %79 = vmatpush1.bf16.msra.mxu0 0
    %80 = vmatprep.subr.bf16.mxu0 0
    %81 = vmatpush1.bf16.msra.mxu0 0
    %82 = vmatprep.subr.bf16.mxu0 0
    %83 = vmatpush1.bf16.msra.mxu0 0
    %84 = vmatprep.subr.bf16.mxu0 0
    %85 = vmatpush1.bf16.msra.mxu0 0
    %86 = vmatprep.subr.bf16.mxu0 0
    %87 = vmatpush1.bf16.msra.mxu0 0
    %88 = vmatprep.subr.bf16.mxu0 0
    %89 = vmatpush1.bf16.msra.mxu0 0
    %90 = vmatprep.subr.bf16.mxu0 0
    %91 = vmatpush1.bf16.msra.mxu0 0
    %92 = vmatprep.subr.bf16.mxu0 0
    %93 = vmatpush1.bf16.msra.mxu0 0
    %94 = vmatprep.subr.bf16.mxu0 0
    %95 = vmatpush1.bf16.msra.mxu0 0
    %96 = vmatprep.subr.bf16.mxu0 0
    %97 = vmatpush1.bf16.msra.mxu0 0
    %98 = vmatprep.subr.bf16.mxu0 0
    %99 = vmatpush1.bf16.msra.mxu0 0
    %100 = vmatprep.subr.bf16.mxu0 0
    %101 = vmatpush1.bf16.msra.mxu0 0
    %102 = vmatprep.subr.bf16.mxu0 0
    %103 = vmatpush1.bf16.msra.mxu0 0
    %104 = vmatprep.subr.bf16.mxu0 0
    %105 = vmatpush1.bf16.msra.mxu0 0
    %106 = vmatprep.subr.bf16.mxu0 0
    %107 = vmatpush1.bf16.msra.mxu0 0
    %108 = vmatprep.mubr.bf16.mxu0 0
    %109 = vmatmul.mubr.bf16.gmra.mrb[0].mxu0 %v70
    %v110 = vpop.f32.mrb[0].mxu0
    %v111 = vadd.f32 0.0, %v110
    %v112 = vpop.f32.mrb[0].mxu0
    %v113 = vpop.f32.mrb[0].mxu0
    %v114 = vpop.f32.mrb[0].mxu0
    %115 = vdwg.mxu0
    %v118 = vunpack.c.l.b16 %v65
    %v119 = vunpack.c.l.b16 %v66
    %v120 = vpack.c.b16 %v119, %v118
    %vm121 = vcmask 97280
    %v123 = vsel %vm121, %v62, 0
    %vm125 = vcmask 1045504
    %v127 = vsel %vm125, %v120, 0
    %129 = vmatprep.subr.bf16.mxu0 0
    %130 = vmatpush1.bf16.msra.mxu0 %v127
    %131 = vmatprep.subr.bf16.mxu0 0
    %132 = vmatpush1.bf16.msra.mxu0 0
    %133 = vmatprep.subr.bf16.mxu0 0
    %134 = vmatpush1.bf16.msra.mxu0 0
    %135 = vmatprep.subr.bf16.mxu0 0
    %136 = vmatpush1.bf16.msra.mxu0 0
    %137 = vmatprep.subr.bf16.mxu0 0
    %138 = vmatpush1.bf16.msra.mxu0 0
    %139 = vmatprep.subr.bf16.mxu0 0
    %140 = vmatpush1.bf16.msra.mxu0 0
    %141 = vmatprep.subr.bf16.mxu0 0
    %142 = vmatpush1.bf16.msra.mxu0 0
    %143 = vmatprep.subr.bf16.mxu0 0
    %144 = vmatpush1.bf16.msra.mxu0 0
    %145 = vmatprep.subr.bf16.mxu0 0
    %146 = vmatpush1.bf16.msra.mxu0 0
    %147 = vmatprep.subr.bf16.mxu0 0
    %148 = vmatpush1.bf16.msra.mxu0 0
    %149 = vmatprep.subr.bf16.mxu0 0
    %150 = vmatpush1.bf16.msra.mxu0 0
    %151 = vmatprep.subr.bf16.mxu0 0
    %152 = vmatpush1.bf16.msra.mxu0 0
    %153 = vmatprep.subr.bf16.mxu0 0
    %154 = vmatpush1.bf16.msra.mxu0 0
    %155 = vmatprep.subr.bf16.mxu0 0
    %156 = vmatpush1.bf16.msra.mxu0 0
    %157 = vmatprep.subr.bf16.mxu0 0
    %158 = vmatpush1.bf16.msra.mxu0 0
    %159 = vmatprep.subr.bf16.mxu0 0
    %160 = vmatpush1.bf16.msra.mxu0 0
    %161 = vmatprep.mubr.bf16.mxu0 0
    %162 = vmatmul.mubr.bf16.gmra.mrb[0].mxu0 %v123
    %v163 = vpop.f32.mrb[0].mxu0
    %v164 = vadd.f32 %v111, %v163
    %v165 = vpop.f32.mrb[0].mxu0
    %v166 = vpop.f32.mrb[0].mxu0
    %v167 = vpop.f32.mrb[0].mxu0
    %168 = vdwg.mxu0
    %v169 = vld [vmem:[%s4] sm:$0x1]
    %v171 = vlaneseq
    %v172 = vshrl.u32 %v171, 7
    %v173 = vsub.s32 0, %v172
    %v174 = vrot.slane %v169, %v173
    %v176 = vadd.f32 %v164, %v174
    %v177 = vmax.f32 %v176, 0.0
    %v178 = vpack.c.bf16 %v177, %v177
    %v179 = vld [vmem:[%s5] sm:$0xf]
    %v180 = vld [vmem:[%s5 + $0x4] sm:$0xf]
    %v181 = vld [vmem:[%s5 + $0x8] sm:$0xf]
    %v182 = vld [vmem:[%s5 + $0xc] sm:$0xf]
    %v187 = vunpack.c.l.b16 %v179
    %v188 = vunpack.c.l.b16 %v180
    %v189 = vunpack.c.l.b16 %v181
    %v190 = vunpack.c.l.b16 %v182
    %v191 = vpack.c.b16 %v188, %v187
    %v192 = vpack.c.b16 %v190, %v189
    %vm195 = vcmask 261120
    %v197 = vsel %vm195, %v178, 0
    %199 = vmatprep.subr.bf16.mxu0 0
    %200 = vmatpush1.bf16.msra.mxu0 %v191
    %201 = vmatprep.subr.bf16.mxu0 0
    %202 = vmatpush1.bf16.msra.mxu0 %v192
    %203 = vmatprep.subr.bf16.mxu0 0
    %204 = vmatpush1.bf16.msra.mxu0 0
    %205 = vmatprep.subr.bf16.mxu0 0
    %206 = vmatpush1.bf16.msra.mxu0 0
    %207 = vmatprep.subr.bf16.mxu0 0
    %208 = vmatpush1.bf16.msra.mxu0 0
    %209 = vmatprep.subr.bf16.mxu0 0
    %210 = vmatpush1.bf16.msra.mxu0 0
    %211 = vmatprep.subr.bf16.mxu0 0
    %212 = vmatpush1.bf16.msra.mxu0 0
    %213 = vmatprep.subr.bf16.mxu0 0
    %214 = vmatpush1.bf16.msra.mxu0 0
    %215 = vmatprep.subr.bf16.mxu0 0
    %216 = vmatpush1.bf16.msra.mxu0 0
    %217 = vmatprep.subr.bf16.mxu0 0
    %218 = vmatpush1.bf16.msra.mxu0 0
    %219 = vmatprep.subr.bf16.mxu0 0
    %220 = vmatpush1.bf16.msra.mxu0 0
    %221 = vmatprep.subr.bf16.mxu0 0
    %222 = vmatpush1.bf16.msra.mxu0 0
    %223 = vmatprep.subr.bf16.mxu0 0
    %224 = vmatpush1.bf16.msra.mxu0 0
    %225 = vmatprep.subr.bf16.mxu0 0
    %226 = vmatpush1.bf16.msra.mxu0 0
    %227 = vmatprep.subr.bf16.mxu0 0
    %228 = vmatpush1.bf16.msra.mxu0 0
    %229 = vmatprep.subr.bf16.mxu0 0
    %230 = vmatpush1.bf16.msra.mxu0 0
    %231 = vmatprep.mubr.bf16.mxu0 0
    %232 = vmatmul.mubr.bf16.gmra.mrb[0].mxu0 %v197
    %v233 = vpop.f32.mrb[0].mxu0
    %v234 = vadd.f32 0.0, %v233
    %v235 = vpop.f32.mrb[0].mxu0
    %v236 = vpop.f32.mrb[0].mxu0
    %v237 = vpop.f32.mrb[0].mxu0
    %238 = vdwg.mxu0
    %v239 = vld [vmem:[%s6] sm:$0xf]
    %v240 = vld [vmem:[%s6 + $0x4] sm:$0xf]
    %v241 = vld [vmem:[%s6 + $0x8] sm:$0xf]
    %v242 = vld [vmem:[%s6 + $0xc] sm:$0xf]
    %244 = vrot.lane.b32.xlu0 %v178, 96
    %v245 = vpop.permute.xlu0 %244
    %v250 = vunpack.c.l.b16 %v239
    %v251 = vunpack.c.l.b16 %v240
    %v252 = vunpack.c.l.b16 %v241
    %v253 = vunpack.c.l.b16 %v242
    %v254 = vpack.c.b16 %v251, %v250
    %v255 = vpack.c.b16 %v253, %v252
    %v259 = vsel %vm195, %v245, 0
    %261 = vmatprep.subr.bf16.mxu0 0
    %262 = vmatpush1.bf16.msra.mxu0 %v254
    %263 = vmatprep.subr.bf16.mxu0 0
    %264 = vmatpush1.bf16.msra.mxu0 %v255
    %265 = vmatprep.subr.bf16.mxu0 0
    %266 = vmatpush1.bf16.msra.mxu0 0
    %267 = vmatprep.subr.bf16.mxu0 0
    %268 = vmatpush1.bf16.msra.mxu0 0
    %269 = vmatprep.subr.bf16.mxu0 0
    %270 = vmatpush1.bf16.msra.mxu0 0
    %271 = vmatprep.subr.bf16.mxu0 0
    %272 = vmatpush1.bf16.msra.mxu0 0
    %273 = vmatprep.subr.bf16.mxu0 0
    %274 = vmatpush1.bf16.msra.mxu0 0
    %275 = vmatprep.subr.bf16.mxu0 0
    %276 = vmatpush1.bf16.msra.mxu0 0
    %277 = vmatprep.subr.bf16.mxu0 0
    %278 = vmatpush1.bf16.msra.mxu0 0
    %279 = vmatprep.subr.bf16.mxu0 0
    %280 = vmatpush1.bf16.msra.mxu0 0
    %281 = vmatprep.subr.bf16.mxu0 0
    %282 = vmatpush1.bf16.msra.mxu0 0
    %283 = vmatprep.subr.bf16.mxu0 0
    %284 = vmatpush1.bf16.msra.mxu0 0
    %285 = vmatprep.subr.bf16.mxu0 0
    %286 = vmatpush1.bf16.msra.mxu0 0
    %287 = vmatprep.subr.bf16.mxu0 0
    %288 = vmatpush1.bf16.msra.mxu0 0
    %289 = vmatprep.subr.bf16.mxu0 0
    %290 = vmatpush1.bf16.msra.mxu0 0
    %291 = vmatprep.subr.bf16.mxu0 0
    %292 = vmatpush1.bf16.msra.mxu0 0
    %293 = vmatprep.mubr.bf16.mxu0 0
    %294 = vmatmul.mubr.bf16.gmra.mrb[0].mxu0 %v259
    %v295 = vpop.f32.mrb[0].mxu0
    %v296 = vadd.f32 0.0, %v295
    %v297 = vpop.f32.mrb[0].mxu0
    %v298 = vpop.f32.mrb[0].mxu0
    %v299 = vpop.f32.mrb[0].mxu0
    %300 = vdwg.mxu0
    %302 = vrot.lane.b32.xlu0 %v296, 32
    %v303 = vpop.permute.xlu0 %302
    %v305 = vsel %vm195, %v234, %v303
    %v306 = vld [vmem:[%s7] sm:$0x1]
    %v308 = vlaneseq
    %v309 = vshrl.u32 %v308, 7
    %v310 = vsub.s32 0, %v309
    %v311 = vrot.slane %v306, %v310
    %v313 = vadd.f32 %v305, %v311
    %v314 = vmax.f32 %v313, 0.0
    %v315 = vpack.c.bf16 %v314, %v314
    %v316 = vld [vmem:[%s8] sm:$0xf]
    %v317 = vld [vmem:[%s8 + $0x4] sm:$0xf]
    %v318 = vld [vmem:[%s8 + $0x8] sm:$0xf]
    %v319 = vld [vmem:[%s8 + $0xc] sm:$0xf]
    %v320 = vld [vmem:[%s8 + $0x10] sm:$0xf]
    %v321 = vld [vmem:[%s8 + $0x14] sm:$0xf]
    %v322 = vld [vmem:[%s8 + $0x18] sm:$0xf]
    %v323 = vld [vmem:[%s8 + $0x1c] sm:$0xf]
    %v324 = vld [vmem:[%s9] sm:$0x1]
    %v326 = vlaneseq
    %v327 = vshrl.u32 %v326, 7
    %v328 = vsub.s32 0, %v327
    %v329 = vrot.slane %v324, %v328
    %v339 = vunpack.c.l.b16 %v316
    %v340 = vunpack.c.l.b16 %v317
    %v341 = vunpack.c.l.b16 %v318
    %v342 = vunpack.c.l.b16 %v319
    %v343 = vunpack.c.l.b16 %v320
    %v344 = vunpack.c.l.b16 %v321
    %v345 = vunpack.c.l.b16 %v322
    %v346 = vunpack.c.l.b16 %v323
    %v347 = vpack.c.b16 %v340, %v339
    %v348 = vpack.c.b16 %v342, %v341
    %v349 = vpack.c.b16 %v344, %v343
    %v350 = vpack.c.b16 %v346, %v345
    %vm355 = vcmask 523264
    %v357 = vsel %vm355, %v315, 0
    %359 = vmatprep.subr.bf16.mxu0 0
    %360 = vmatpush1.bf16.msra.mxu0 %v347
    %361 = vmatprep.subr.bf16.mxu0 0
    %362 = vmatpush1.bf16.msra.mxu0 %v348
    %363 = vmatprep.subr.bf16.mxu0 0
    %364 = vmatpush1.bf16.msra.mxu0 %v349
    %365 = vmatprep.subr.bf16.mxu0 0
    %366 = vmatpush1.bf16.msra.mxu0 %v350
    %367 = vmatprep.subr.bf16.mxu0 0
    %368 = vmatpush1.bf16.msra.mxu0 0
    %369 = vmatprep.subr.bf16.mxu0 0
    %370 = vmatpush1.bf16.msra.mxu0 0
    %371 = vmatprep.subr.bf16.mxu0 0
    %372 = vmatpush1.bf16.msra.mxu0 0
    %373 = vmatprep.subr.bf16.mxu0 0
    %374 = vmatpush1.bf16.msra.mxu0 0
    %375 = vmatprep.subr.bf16.mxu0 0
    %376 = vmatpush1.bf16.msra.mxu0 0
    %377 = vmatprep.subr.bf16.mxu0 0
    %378 = vmatpush1.bf16.msra.mxu0 0
    %379 = vmatprep.subr.bf16.mxu0 0
    %380 = vmatpush1.bf16.msra.mxu0 0
    %381 = vmatprep.subr.bf16.mxu0 0
    %382 = vmatpush1.bf16.msra.mxu0 0
    %383 = vmatprep.subr.bf16.mxu0 0
    %384 = vmatpush1.bf16.msra.mxu0 0
    %385 = vmatprep.subr.bf16.mxu0 0
    %386 = vmatpush1.bf16.msra.mxu0 0
    %387 = vmatprep.subr.bf16.mxu0 0
    %388 = vmatpush1.bf16.msra.mxu0 0
    %389 = vmatprep.subr.bf16.mxu0 0
    %390 = vmatpush1.bf16.msra.mxu0 0
    %391 = vmatprep.mubr.bf16.mxu0 0
    %392 = vmatmul.mubr.bf16.gmra.mrb[0].mxu0 %v357
    %v393 = vpop.f32.mrb[0].mxu0
    %v394 = vadd.f32 %v329, %v393
    %v395 = vpop.f32.mrb[0].mxu0
    %v396 = vpop.f32.mrb[0].mxu0
    %v397 = vpop.f32.mrb[0].mxu0
    %398 = vdwg.mxu0
    %399 = vxpose.xlu0.b32.start [1/16] %v394, 128
    %400 = vxpose.xlu0.b32.cont [2/16] 0.0, 128
    %401 = vxpose.xlu0.b32.cont [3/16] 0.0, 128
    %402 = vxpose.xlu0.b32.cont [4/16] 0.0, 128
    %403 = vxpose.xlu0.b32.cont [5/16] 0.0, 128
    %404 = vxpose.xlu0.b32.cont [6/16] 0.0, 128
    %405 = vxpose.xlu0.b32.cont [7/16] 0.0, 128
    %406 = vxpose.xlu0.b32.cont [8/16] 0.0, 128
    %407 = vxpose.xlu0.b32.cont [9/16] 0.0, 128
    %408 = vxpose.xlu0.b32.cont [10/16] 0.0, 128
    %409 = vxpose.xlu0.b32.cont [11/16] 0.0, 128
    %410 = vxpose.xlu0.b32.cont [12/16] 0.0, 128
    %411 = vxpose.xlu0.b32.cont [13/16] 0.0, 128
    %412 = vxpose.xlu0.b32.cont [14/16] 0.0, 128
    %413 = vxpose.xlu0.b32.cont [15/16] 0.0, 128
    %414 = vxpose.xlu0.b32.end [16/16] 0.0, 128
    %v415 = vpop.trf.xlu0
    %v416 = vpop.trf.xlu0
    %v417 = vpop.trf.xlu0
    %v418 = vpop.trf.xlu0
    %v419 = vpop.trf.xlu0
    %v420 = vpop.trf.xlu0
    %v421 = vpop.trf.xlu0
    %v422 = vpop.trf.xlu0
    %v423 = vpop.trf.xlu0
    %v424 = vpop.trf.xlu0
    %v425 = vpop.trf.xlu0
    %v426 = vpop.trf.xlu0
    %v427 = vpop.trf.xlu0
    %v428 = vpop.trf.xlu0
    %v429 = vpop.trf.xlu0
    %v430 = vpop.trf.xlu0
    %vm431 = vcmask 9216
    %432 = vst.msk [vmem:[#allocation7] sm:$0x3] %vm431, %v415
    // Predicated region
    $region50: #{tpu_custom_call.1} parent=1 // pred_check
      _
    $region51: #{tpu_custom_call.1} parent=1 // pred_check_branch
      %434 = sbr.rel (0) target = $region53
    $region52: #{tpu_custom_call.1} parent=1 // pred_region
      %s436 = ssub.s32 32, 32
      %437 = vsyncadd [#allocation4], %s436
      %s439 = sshll.u32 [#allocation7], 4
      %s440 = int_to_ptr.vmem [resolvable:$true] %s439
      %442 = dma.vmem_to_hbm [thread:$0]  %s440, 32, %s10, [#allocation4]
    $region53: #{tpu_custom_call.1} parent=1 // pred_fallthru
      _
    // Predicated region
    $region54: #{tpu_custom_call.1} parent=1 // pred_check
      _
    $region55: #{tpu_custom_call.1} parent=1 // pred_check_branch
      %444 = sbr.rel (0) target = $region57
    $region56: #{tpu_custom_call.1} parent=1 // pred_region
      %445 = dma.done [#allocation4], 32
    $region57: #{tpu_custom_call.1} parent=1 // pred_fallthru
      _
    %446 = vsyncpa [#allocation3], 1
    %447 = vsyncpa [#allocation6], 1
    %448 = vsyncpa [#allocation4], 1

</llo_original>
